<compile_context>
chip_gen: v7x
topology: tpu7x:2x2x1
jax: 0.10.0
libtpu: 0.0.40
codegen_flags: <defaults>
</compile_context>

<pallas_src>
import functools

import jax
import jax.numpy as jnp
from jax.experimental import pallas as pl
from jax.experimental.pallas import tpu as pltpu


def _smv_matmul_kernel(v_ref, w_ref, o_ref, acc_ref):
    # v_ref: (bb, tc, ts)  -- values tile        (C x S)
    # w_ref: (bb, ts, tt)  -- transposed weights (S x T)
    # o_ref: (bb, tc, tt)  -- output tile        (C x T)
    # acc_ref: (bb, tc, tt) f32 accumulator, resident across the S grid axis.
    k = pl.program_id(3)

    @pl.when(k == 0)
    def _init():
        acc_ref[...] = jnp.zeros_like(acc_ref)

    # Batched matmul on the MXU, f32 accumulation.
    acc_ref[...] += jnp.einsum(
        "bcs,bst->bct",
        v_ref[...],
        w_ref[...],
        preferred_element_type=jnp.float32,
    )

    @pl.when(k == pl.num_programs(3) - 1)
    def _finalize():
        o_ref[...] = acc_ref[...].astype(o_ref.dtype)


def _round_up(x, m):
    return ((x + m - 1) // m) * m


@functools.partial(
    jax.jit, static_argnames=("compute_dtype", "block_c", "block_t", "block_s", "block_b")
)
def quant_smv_matmul(
    weight,
    v,
    *,
    compute_dtype=jnp.bfloat16,   # set to None to keep input precision
    block_c=256,
    block_t=256,
    block_s=512,
    block_b=8,
):
    """weight: (B, T, S), v: (B, C, S) -> (B, C, T); matches einsum('bts,bcs->bct')."""
    B, T, S = weight.shape
    Bv, C, Sv = v.shape
    assert B == Bv and S == Sv, "shape mismatch between weight and v"

    out_dtype = jnp.result_type(weight.dtype, v.dtype)

    # bf16 inputs halve HBM traffic and ~4x MXU throughput; accumulation stays f32.
    if compute_dtype is not None:
        weight = weight.astype(compute_dtype)
        v = v.astype(compute_dtype)

    # MXU-friendly RHS layout: (B, S, T) so contraction is sublane-major on the
    # RHS and the output lane dim is T (lane-dense stores).
    wt = jnp.transpose(weight, (0, 2, 1))  # (B, S, T)

    # Tile sizes, clamped to the hardware-padded problem dims.
    tc = min(block_c, _round_up(C, 8))     # sublane dim of v / out tiles
    tt = min(block_t, _round_up(T, 128))   # lane dim of wt / out tiles
    ts = min(block_s, _round_up(S, 128))   # lane dim of v, sublane dim of wt

    # If the per-batch tiles are too small to keep the MXU busy, pack several
    # batch elements into one grid step to amortize per-step overhead.
    if tc >= 128 and tt >= 128 and ts >= 256:
        bb = 1
    else:
        bb = min(B, block_b)

    Bp = _round_up(B, bb)
    Cp = _round_up(C, tc)
    Tp = _round_up(T, tt)
    Sp = _round_up(S, ts)

    vp = v
    if (Bp, Cp, Sp) != (B, C, S):
        vp = jnp.pad(v, ((0, Bp - B), (0, Cp - C), (0, Sp - S)))
    wtp = wt
    if (Bp, Sp, Tp) != (B, S, T):
        wtp = jnp.pad(wt, ((0, Bp - B), (0, Sp - S), (0, Tp - T)))

    grid = (Bp // bb, Cp // tc, Tp // tt, Sp // ts)

    out = pl.pallas_call(
        _smv_matmul_kernel,
        out_shape=jax.ShapeDtypeStruct((Bp, Cp, Tp), out_dtype),
        grid_spec=pltpu.PrefetchScalarGridSpec(
            num_scalar_prefetch=0,
            grid=grid,
            in_specs=[
                pl.BlockSpec((bb, tc, ts), lambda b, i, j, k: (b, i, k)),
                pl.BlockSpec((bb, ts, tt), lambda b, i, j, k: (b, k, j)),
            ],
            out_specs=pl.BlockSpec((bb, tc, tt), lambda b, i, j, k: (b, i, j)),
            scratch_shapes=[pltpu.VMEM((bb, tc, tt), jnp.float32)],
        ),
        compiler_params=pltpu.CompilerParams(
            dimension_semantics=("parallel", "parallel", "parallel", "arbitrary"),
        ),
    )(vp, wtp)

    if (Bp, Cp, Tp) != (B, C, T):
        out = out[:B, :C, :T]
    return out


if __name__ == "__main__":
    # Small shapes consistent with the forward: attention weights (B, T, S)
    # and values (B, C, S).
    B, T, S, C = 2, 16, 16, 8

    key = jax.random.PRNGKey(0)
    k_w, k_v = jax.random.split(key)
    weight = jax.random.normal(k_w, (B, T, S), dtype=jnp.float32)
    v = jax.random.normal(k_v, (B, C, S), dtype=jnp.float32)

    out = quant_smv_matmul(weight, v)
    out = jax.block_until_ready(out)
    assert out.shape == (B, C, T)
    assert out.dtype == jnp.float32

    # Reference: the kernel rounds inputs to bf16 (f32 accumulation), so
    # compare against the einsum of bf16-rounded inputs.
    w_bf = weight.astype(jnp.bfloat16).astype(jnp.float32)
    v_bf = v.astype(jnp.bfloat16).astype(jnp.float32)
    ref = jnp.einsum("bts,bcs->bct", w_bf, v_bf)
    assert jnp.allclose(out, ref, atol=1e-2, rtol=1e-2), "mismatch vs reference"

    print("KERNEL_OK")
</pallas_src>

<mosaic_0001>
module attributes {stable_mosaic.version = 11 : i64} {
  func.func @_smv_matmul_kernel(%arg0: i32, %arg1: i32, %arg2: i32, %arg3: i32, %arg4: memref<2x8x128xbf16, #tpu.memory_space<vmem>>, %arg5: memref<2x128x128xbf16, #tpu.memory_space<vmem>>, %arg6: memref<2x8x128xf32, #tpu.memory_space<vmem>>, %arg7: memref<2x8x128xf32, #tpu.memory_space<vmem>>) attributes {dimension_semantics = [#tpu.dimension_semantics<parallel>, #tpu.dimension_semantics<parallel>, #tpu.dimension_semantics<parallel>, #tpu.dimension_semantics<arbitrary>], iteration_bounds = array<i64: 1, 1, 1, 1>, scalar_prefetch = 0 : i64, scratch_operands = 1 : i64, tpu.core_type = #tpu.core_type<tc>, window_params = [{transform_indices = @transform_0, window_bounds = array<i64: 2, 8, 128>}, {transform_indices = @transform_1, window_bounds = array<i64: 2, 128, 128>}, {transform_indices = @transform_2, window_bounds = array<i64: 2, 8, 128>}]} {
    %c0_i32 = arith.constant 0 : i32
    %0 = arith.cmpi eq, %arg3, %c0_i32 : i32
    %1 = arith.extui %0 : i1 to i32
    %c0_i32_0 = arith.constant 0 : i32
    %2 = arith.cmpi ne, %1, %c0_i32_0 : i32
    scf.if %2 {
      %cst_14 = arith.constant 0.000000e+00 : f32
      %12 = vector.broadcast %cst_14 : f32 to vector<2x8x128xf32>
      %c0_15 = arith.constant 0 : index
      %c0_16 = arith.constant 0 : index
      %c0_17 = arith.constant 0 : index
      %13 = vector.load %arg7[%c0_15, %c0_16, %c0_17] : memref<2x8x128xf32, #tpu.memory_space<vmem>>, vector<2x8x128xf32>
      tpu.vector_store %arg7[%c0_15, %c0_16, %c0_17], %12 {strides = array<i32>} : memref<2x8x128xf32, #tpu.memory_space<vmem>>, vector<2x8x128xf32>,
    } else {
    }
    %c0 = arith.constant 0 : index
    %c0_1 = arith.constant 0 : index
    %c0_2 = arith.constant 0 : index
    %3 = vector.load %arg7[%c0, %c0_1, %c0_2] : memref<2x8x128xf32, #tpu.memory_space<vmem>>, vector<2x8x128xf32>
    %c0_3 = arith.constant 0 : index
    %c0_4 = arith.constant 0 : index
    %c0_5 = arith.constant 0 : index
    %4 = vector.load %arg4[%c0_3, %c0_4, %c0_5] : memref<2x8x128xbf16, #tpu.memory_space<vmem>>, vector<2x8x128xbf16>
    %c0_6 = arith.constant 0 : index
    %c0_7 = arith.constant 0 : index
    %c0_8 = arith.constant 0 : index
    %5 = vector.load %arg5[%c0_6, %c0_7, %c0_8] : memref<2x128x128xbf16, #tpu.memory_space<vmem>>, vector<2x128x128xbf16>
    "tpu.trace_start"() <{level = 10 : i32, message = "bcs,bst->bct"}> : () -> ()
    %cst = arith.constant dense<0.000000e+00> : vector<2x8x128xf32>
    %6 = tpu.matmul %4, %5, %cst {dimension_numbers = #tpu.dot_dimension_numbers<[2], [1], [1], [2], [0, 0, 0, 1, 1, 2], [0], [0]>} : vector<2x8x128xbf16>, vector<2x128x128xbf16>, vector<2x8x128xf32> -> vector<2x8x128xf32>
    "tpu.trace_stop"() : () -> ()
    %7 = arith.addf %3, %6 : vector<2x8x128xf32>
    %c0_9 = arith.constant 0 : index
    %c0_10 = arith.constant 0 : index
    %c0_11 = arith.constant 0 : index
    %8 = vector.load %arg7[%c0_9, %c0_10, %c0_11] : memref<2x8x128xf32, #tpu.memory_space<vmem>>, vector<2x8x128xf32>
    tpu.vector_store %arg7[%c0_9, %c0_10, %c0_11], %7 {strides = array<i32>} : memref<2x8x128xf32, #tpu.memory_space<vmem>>, vector<2x8x128xf32>,
    %c0_i32_12 = arith.constant 0 : i32
    %9 = arith.cmpi eq, %arg3, %c0_i32_12 : i32
    %10 = arith.extui %9 : i1 to i32
    %c0_i32_13 = arith.constant 0 : i32
    %11 = arith.cmpi ne, %10, %c0_i32_13 : i32
    scf.if %11 {
      %c0_14 = arith.constant 0 : index
      %c0_15 = arith.constant 0 : index
      %c0_16 = arith.constant 0 : index
      %12 = vector.load %arg7[%c0_14, %c0_15, %c0_16] : memref<2x8x128xf32, #tpu.memory_space<vmem>>, vector<2x8x128xf32>
      %c0_17 = arith.constant 0 : index
      %c0_18 = arith.constant 0 : index
      %c0_19 = arith.constant 0 : index
      %13 = vector.load %arg6[%c0_17, %c0_18, %c0_19] : memref<2x8x128xf32, #tpu.memory_space<vmem>>, vector<2x8x128xf32>
      tpu.vector_store %arg6[%c0_17, %c0_18, %c0_19], %12 {strides = array<i32>} : memref<2x8x128xf32, #tpu.memory_space<vmem>>, vector<2x8x128xf32>,
    } else {
    }
    return
  }
  func.func @transform_0(%arg0: i32, %arg1: i32, %arg2: i32, %arg3: i32) -> (i32, i32, i32) {
    %c0_i32 = arith.constant 0 : i32
    return %arg0, %arg1, %arg3 : i32, i32, i32
  }
  func.func @transform_1(%arg0: i32, %arg1: i32, %arg2: i32, %arg3: i32) -> (i32, i32, i32) {
    %c0_i32 = arith.constant 0 : i32
    return %arg0, %arg3, %arg2 : i32, i32, i32
  }
  func.func @transform_2(%arg0: i32, %arg1: i32, %arg2: i32, %arg3: i32) -> (i32, i32, i32) {
    %c0_i32 = arith.constant 0 : i32
    return %arg0, %arg1, %arg2 : i32, i32, i32
  }
}

</mosaic_0001>

<llo_original>
// kernel: quant_smv_matmul.1
$region0: #{quant_smv_matmul.1}
  #allocation0 [shape = 'u32[]', space=smem, size = 0x4, offset = 0x4, fixed_abs, tag = 'smem constant byte address 0x4 - core index']
  #allocation1 [shape = 'u32[144,128]{1,0:T(1,128)}', space=vmem, size = 0x12000, scoped, tag = 'internal scratch']
  #allocation2 [shape = 'f32[2,8,128]{2,1,0:T(8,128)}', space=vmem, size = 0x2000, scoped, tag = 'scratch operand']
  %s0 = inlined_call_operand.vmem [shape: bf16[2,8,128], index: 0, kind: input, shape index: {}]
  %s1 = inlined_call_operand.vmem [shape: bf16[2,128,128], index: 1, kind: input, shape index: {}]
  %s2 = inlined_call_operand.hbm [shape: f32[2,8,128], index: 2, kind: output, shape index: {}]
  %s3 = sld [smem:[#allocation0]]
  $region26: #{quant_smv_matmul.1} parent=0
    _
  %s5 = ssub.s32 1, %s3
  %s6 = scalar_select 0, %s5, %s3
  $region1: #{quant_smv_matmul.1} parent=0
    #allocation3 [shape = 'u8[8192]{0}', space=vmem, size = 0x2000, scoped, tag = 'output window, operand 0, single buffered']
    #allocation4 [shape = 's32[1]{0}', space=sflag, size = 0x4, scoped, tag = 'scoped memory for quant_smv_matmul.1']
    %7 = vsyncpa [#allocation4], 0
    // Predicated region
    $region2: #{quant_smv_matmul.1} parent=1 // pred_check
      _
    $region3: #{quant_smv_matmul.1} parent=1 // pred_check_branch
      %9 = sbr.rel (0) target = $region5
    $region4: #{quant_smv_matmul.1} parent=1 // pred_region
      _
    $region5: #{quant_smv_matmul.1} parent=1 // pred_fallthru
      _
    // Predicated region
    $region6: #{quant_smv_matmul.1} parent=1 // pred_check
      _
    $region7: #{quant_smv_matmul.1} parent=1 // pred_check_branch
      %11 = sbr.rel (0) target = $region9
    $region8: #{quant_smv_matmul.1} parent=1 // pred_region
      _
    $region9: #{quant_smv_matmul.1} parent=1 // pred_fallthru
      _
    %p13 = scmp.eq.s32.totalorder 0, 0
    // Predicated region
    $region10: #{quant_smv_matmul.1} parent=1 // pred_check
      %p14 = pneg %p13
    $region11: #{quant_smv_matmul.1} parent=1 // pred_check_branch
      %16 = sbr.rel (%p14) target = $region13
    $region12: #{quant_smv_matmul.1} parent=1 // pred_region
      %17 = vst [vmem:[#allocation2] sm:$0xff] 0.0
      %18 = vst [vmem:[#allocation2 + $0x8] sm:$0xff] 0.0
    $region13: #{quant_smv_matmul.1} parent=1 // pred_fallthru
      _
    %v19 = vld [vmem:[#allocation2] sm:$0xff]
    %v20 = vld [vmem:[#allocation2 + $0x8] sm:$0xff]
    %v21 = vld [vmem:[%s0] sm:$0xf]
    %v22 = vld [vmem:[%s0 + $0x4] sm:$0xf]
    %v23 = vld [vmem:[%s1] sm:$0xf]
    %v24 = vld [vmem:[%s1 + $0x4] sm:$0xf]
    %v25 = vld [vmem:[%s1 + $0x8] sm:$0xf]
    %v26 = vld [vmem:[%s1 + $0xc] sm:$0xf]
    %v27 = vld [vmem:[%s1 + $0x10] sm:$0xf]
    %v28 = vld [vmem:[%s1 + $0x14] sm:$0xf]
    %v29 = vld [vmem:[%s1 + $0x18] sm:$0xf]
    %v30 = vld [vmem:[%s1 + $0x1c] sm:$0xf]
    %v31 = vld [vmem:[%s1 + $0x20] sm:$0xf]
    %v32 = vld [vmem:[%s1 + $0x24] sm:$0xf]
    %v33 = vld [vmem:[%s1 + $0x28] sm:$0xf]
    %v34 = vld [vmem:[%s1 + $0x2c] sm:$0xf]
    %v35 = vld [vmem:[%s1 + $0x30] sm:$0xf]
    %v36 = vld [vmem:[%s1 + $0x34] sm:$0xf]
    %v37 = vld [vmem:[%s1 + $0x38] sm:$0xf]
    %v38 = vld [vmem:[%s1 + $0x3c] sm:$0xf]
    %v39 = vld [vmem:[%s1 + $0x40] sm:$0xf]
    %v40 = vld [vmem:[%s1 + $0x44] sm:$0xf]
    %v41 = vld [vmem:[%s1 + $0x48] sm:$0xf]
    %v42 = vld [vmem:[%s1 + $0x4c] sm:$0xf]
    %v43 = vld [vmem:[%s1 + $0x50] sm:$0xf]
    %v44 = vld [vmem:[%s1 + $0x54] sm:$0xf]
    %v45 = vld [vmem:[%s1 + $0x58] sm:$0xf]
    %v46 = vld [vmem:[%s1 + $0x5c] sm:$0xf]
    %v47 = vld [vmem:[%s1 + $0x60] sm:$0xf]
    %v48 = vld [vmem:[%s1 + $0x64] sm:$0xf]
    %v49 = vld [vmem:[%s1 + $0x68] sm:$0xf]
    %v50 = vld [vmem:[%s1 + $0x6c] sm:$0xf]
    %v51 = vld [vmem:[%s1 + $0x70] sm:$0xf]
    %v52 = vld [vmem:[%s1 + $0x74] sm:$0xf]
    %v53 = vld [vmem:[%s1 + $0x78] sm:$0xf]
    %v54 = vld [vmem:[%s1 + $0x7c] sm:$0xf]
    %v71 = vunpack.c.l.b16 %v23
    %v72 = vunpack.c.l.b16 %v24
    %v73 = vunpack.c.l.b16 %v25
    %v74 = vunpack.c.l.b16 %v26
    %v75 = vunpack.c.l.b16 %v27
    %v76 = vunpack.c.l.b16 %v28
    %v77 = vunpack.c.l.b16 %v29
    %v78 = vunpack.c.l.b16 %v30
    %v79 = vunpack.c.l.b16 %v31
    %v80 = vunpack.c.l.b16 %v32
    %v81 = vunpack.c.l.b16 %v33
    %v82 = vunpack.c.l.b16 %v34
    %v83 = vunpack.c.l.b16 %v35
    %v84 = vunpack.c.l.b16 %v36
    %v85 = vunpack.c.l.b16 %v37
    %v86 = vunpack.c.l.b16 %v38
    %v87 = vpack.c.b16 %v72, %v71
    %v88 = vpack.c.b16 %v74, %v73
    %v89 = vpack.c.b16 %v76, %v75
    %v90 = vpack.c.b16 %v78, %v77
    %v91 = vpack.c.b16 %v80, %v79
    %v92 = vpack.c.b16 %v82, %v81
    %v93 = vpack.c.b16 %v84, %v83
    %v94 = vpack.c.b16 %v86, %v85
    %103 = vmatprep.subr.bf16.mxu0 0
    %104 = vmatpush1.bf16.msra.mxu0 %v87
    %105 = vmatprep.subr.bf16.mxu0 0
    %106 = vmatpush1.bf16.msra.mxu0 %v88
    %107 = vmatprep.subr.bf16.mxu0 0
    %108 = vmatpush1.bf16.msra.mxu0 %v89
    %109 = vmatprep.subr.bf16.mxu0 0
    %110 = vmatpush1.bf16.msra.mxu0 %v90
    %111 = vmatprep.subr.bf16.mxu0 0
    %112 = vmatpush1.bf16.msra.mxu0 %v91
    %113 = vmatprep.subr.bf16.mxu0 0
    %114 = vmatpush1.bf16.msra.mxu0 %v92
    %115 = vmatprep.subr.bf16.mxu0 0
    %116 = vmatpush1.bf16.msra.mxu0 %v93
    %117 = vmatprep.subr.bf16.mxu0 0
    %118 = vmatpush1.bf16.msra.mxu0 %v94
    %119 = vmatprep.subr.bf16.mxu0 0
    %120 = vmatpush1.bf16.msra.mxu0 0
    %121 = vmatprep.subr.bf16.mxu0 0
    %122 = vmatpush1.bf16.msra.mxu0 0
    %123 = vmatprep.subr.bf16.mxu0 0
    %124 = vmatpush1.bf16.msra.mxu0 0
    %125 = vmatprep.subr.bf16.mxu0 0
    %126 = vmatpush1.bf16.msra.mxu0 0
    %127 = vmatprep.subr.bf16.mxu0 0
    %128 = vmatpush1.bf16.msra.mxu0 0
    %129 = vmatprep.subr.bf16.mxu0 0
    %130 = vmatpush1.bf16.msra.mxu0 0
    %131 = vmatprep.subr.bf16.mxu0 0
    %132 = vmatpush1.bf16.msra.mxu0 0
    %133 = vmatprep.subr.bf16.mxu0 0
    %134 = vmatpush1.bf16.msra.mxu0 0
    %135 = vmatprep.mubr.bf16.mxu0 0
    %136 = vmatmul.mubr.bf16.gmra.mrb[0].mxu0 %v21
    %v137 = vpop.f32.mrb[0].mxu0
    %v138 = vadd.f32 0.0, %v137
    %v139 = vpop.f32.mrb[0].mxu0
    %v140 = vpop.f32.mrb[0].mxu0
    %v141 = vpop.f32.mrb[0].mxu0
    %142 = vdwg.mxu0
    %v159 = vunpack.c.l.b16 %v39
    %v160 = vunpack.c.l.b16 %v40
    %v161 = vunpack.c.l.b16 %v41
    %v162 = vunpack.c.l.b16 %v42
    %v163 = vunpack.c.l.b16 %v43
    %v164 = vunpack.c.l.b16 %v44
    %v165 = vunpack.c.l.b16 %v45
    %v166 = vunpack.c.l.b16 %v46
    %v167 = vunpack.c.l.b16 %v47
    %v168 = vunpack.c.l.b16 %v48
    %v169 = vunpack.c.l.b16 %v49
    %v170 = vunpack.c.l.b16 %v50
    %v171 = vunpack.c.l.b16 %v51
    %v172 = vunpack.c.l.b16 %v52
    %v173 = vunpack.c.l.b16 %v53
    %v174 = vunpack.c.l.b16 %v54
    %v175 = vpack.c.b16 %v160, %v159
    %v176 = vpack.c.b16 %v162, %v161
    %v177 = vpack.c.b16 %v164, %v163
    %v178 = vpack.c.b16 %v166, %v165
    %v179 = vpack.c.b16 %v168, %v167
    %v180 = vpack.c.b16 %v170, %v169
    %v181 = vpack.c.b16 %v172, %v171
    %v182 = vpack.c.b16 %v174, %v173
    %191 = vmatprep.subr.bf16.mxu0 0
    %192 = vmatpush1.bf16.msra.mxu0 %v175
    %193 = vmatprep.subr.bf16.mxu0 0
    %194 = vmatpush1.bf16.msra.mxu0 %v176
    %195 = vmatprep.subr.bf16.mxu0 0
    %196 = vmatpush1.bf16.msra.mxu0 %v177
    %197 = vmatprep.subr.bf16.mxu0 0
    %198 = vmatpush1.bf16.msra.mxu0 %v178
    %199 = vmatprep.subr.bf16.mxu0 0
    %200 = vmatpush1.bf16.msra.mxu0 %v179
    %201 = vmatprep.subr.bf16.mxu0 0
    %202 = vmatpush1.bf16.msra.mxu0 %v180
    %203 = vmatprep.subr.bf16.mxu0 0
    %204 = vmatpush1.bf16.msra.mxu0 %v181
    %205 = vmatprep.subr.bf16.mxu0 0
    %206 = vmatpush1.bf16.msra.mxu0 %v182
    %207 = vmatprep.subr.bf16.mxu0 0
    %208 = vmatpush1.bf16.msra.mxu0 0
    %209 = vmatprep.subr.bf16.mxu0 0
    %210 = vmatpush1.bf16.msra.mxu0 0
    %211 = vmatprep.subr.bf16.mxu0 0
    %212 = vmatpush1.bf16.msra.mxu0 0
    %213 = vmatprep.subr.bf16.mxu0 0
    %214 = vmatpush1.bf16.msra.mxu0 0
    %215 = vmatprep.subr.bf16.mxu0 0
    %216 = vmatpush1.bf16.msra.mxu0 0
    %217 = vmatprep.subr.bf16.mxu0 0
    %218 = vmatpush1.bf16.msra.mxu0 0
    %219 = vmatprep.subr.bf16.mxu0 0
    %220 = vmatpush1.bf16.msra.mxu0 0
    %221 = vmatprep.subr.bf16.mxu0 0
    %222 = vmatpush1.bf16.msra.mxu0 0
    %223 = vmatprep.mubr.bf16.mxu0 0
    %224 = vmatmul.mubr.bf16.gmra.mrb[0].mxu0 %v22
    %v225 = vpop.f32.mrb[0].mxu0
    %v226 = vadd.f32 0.0, %v225
    %v227 = vpop.f32.mrb[0].mxu0
    %v228 = vpop.f32.mrb[0].mxu0
    %v229 = vpop.f32.mrb[0].mxu0
    %230 = vdwg.mxu0
    %v231 = vadd.f32 %v19, %v138
    %v232 = vadd.f32 %v20, %v226
    %233 = vst [vmem:[#allocation2] sm:$0xff] %v231
    %234 = vst [vmem:[#allocation2 + $0x8] sm:$0xff] %v232
    // Predicated region
    $region14: #{quant_smv_matmul.1} parent=1 // pred_check
      %p235 = pneg %p13
    $region15: #{quant_smv_matmul.1} parent=1 // pred_check_branch
      %237 = sbr.rel (%p235) target = $region17
    $region16: #{quant_smv_matmul.1} parent=1 // pred_region
      %v238 = vld [vmem:[#allocation2] sm:$0xff]
      %v239 = vld [vmem:[#allocation2 + $0x8] sm:$0xff]
      %240 = vst [vmem:[#allocation3] sm:$0xff] %v238
      %241 = vst [vmem:[#allocation3 + $0x8] sm:$0xff] %v239
    $region17: #{quant_smv_matmul.1} parent=1 // pred_fallthru
      _
    // Predicated region
    $region18: #{quant_smv_matmul.1} parent=1 // pred_check
      _
    $region19: #{quant_smv_matmul.1} parent=1 // pred_check_branch
      %243 = sbr.rel (0) target = $region21
    $region20: #{quant_smv_matmul.1} parent=1 // pred_region
      %s245 = ssub.s32 256, 256
      %246 = vsyncadd [#allocation4], %s245
      %s247 = sshll.u32 [#allocation3], 4
      %s248 = int_to_ptr.vmem [resolvable:$true] %s247
      %253 = dma.vmem_to_hbm [thread:$0]  %s248, 256, %s2, [#allocation4], 128, 128, 8
    $region21: #{quant_smv_matmul.1} parent=1 // pred_fallthru
      _
    // Predicated region
    $region22: #{quant_smv_matmul.1} parent=1 // pred_check
      _
    $region23: #{quant_smv_matmul.1} parent=1 // pred_check_branch
      %255 = sbr.rel (0) target = $region25
    $region24: #{quant_smv_matmul.1} parent=1 // pred_region
      %256 = dma.done [#allocation4], 256
    $region25: #{quant_smv_matmul.1} parent=1 // pred_fallthru
      _
    %257 = vsyncpa [#allocation4], 1

</llo_original>
